<compile_context>
chip_gen: v7x
topology: tpu7x:2x2x1
jax: 0.10.0
libtpu: 0.0.40
codegen_flags: <defaults>
</compile_context>

<pallas_src>
import functools

import jax
import jax.numpy as jnp
from jax.experimental import pallas as pl
from jax.experimental.pallas import tpu as pltpu


D_IN = 3
D_OUT = 2
SEQ = 6     # context_length from the module (batch.shape[1])
BATCH = 2

# Conservative ceiling for the gridless, fully-VMEM-resident design. Keeps us
# well under v7x's 64 MiB physical VMEM / 32 MiB default scoped limit.
_VMEM_RESIDENT_LIMIT_BYTES = 8 * 1024 * 1024


def _attention_kernel(x_ref, wqkv_ref, o_ref, qkv_scratch, *, batch, seq, d_out):
    """Attention forward with everything resident in VMEM (no grid).

    x_ref:        (B*T, d_in)     input rows, batch flattened into rows.
    wqkv_ref:     (d_in, 3*d_out) fused [Wq | Wk | Wv] projection weight.
    o_ref:        (B*T, d_out)    output context vectors.
    qkv_scratch:  (B*T, 3*d_out)  f32 VMEM scratch holding the fused projection.
    """
    x = x_ref[...].astype(jnp.float32)                         # (B*T, d_in)
    wqkv = wqkv_ref[...].astype(jnp.float32)                   # (d_in, 3*d_out)
    scale = 1.0 / jnp.sqrt(jnp.float32(d_out))

    # Single fused QKV projection over ALL B*T rows: one MXU push instead of
    # three per batch item (every matmul here is >95% padding, so the cost is
    # per-push latency, not FLOPs).
    qkv_scratch[...] = jnp.dot(x, wqkv, preferred_element_type=jnp.float32)

    # B is tiny (=2) and static: unroll the batch loop; all slices are static.
    for i in range(batch):
        r0, r1 = i * seq, (i + 1) * seq
        q = qkv_scratch[r0:r1, 0 * d_out:1 * d_out]            # (T, d_out)
        k = qkv_scratch[r0:r1, 1 * d_out:2 * d_out]            # (T, d_out)
        v = qkv_scratch[r0:r1, 2 * d_out:3 * d_out]            # (T, d_out)

        # scores = q @ k^T (contract last dims directly; no explicit transpose).
        scores = jax.lax.dot_general(
            q, k, (((1,), (1,)), ((), ())),
            preferred_element_type=jnp.float32) * scale        # (T, T)

        # NOTE: reference's masked_fill result is discarded -> no causal mask.
        # Numerically stable softmax with an exact f32 divide (kernel is
        # latency-bound; no VLIW slot is anywhere near saturated).
        m = jnp.max(scores, axis=-1, keepdims=True)
        e = jnp.exp(scores - m)
        attn = e / jnp.sum(e, axis=-1, keepdims=True)          # (T, T)

        # dropout p=0.0 -> identity.
        ctx = jnp.dot(attn, v, preferred_element_type=jnp.float32)   # (T, d_out)
        o_ref[r0:r1, :] = ctx.astype(o_ref.dtype)


def fuse_qkv_weights(w_query, w_key, w_value):
    """Build the fused (d_in, 3*d_out) projection ONCE (hoisted out of forward)."""
    return jnp.concatenate([w_query, w_key, w_value], axis=1)


def causal_attention(x, wqkv):
    """x: (B, T, d_in); wqkv: (d_in, 3*d_out) from fuse_qkv_weights.

    Returns (B, T, d_out).
    """
    b, t, d_in = x.shape
    d_out = wqkv.shape[1] // 3

    # Gate the "no grid, whole problem in VMEM" design explicitly.
    itemsize = jnp.dtype(x.dtype).itemsize
    resident_bytes = (b * t * d_in + d_in * 3 * d_out + b * t * d_out) * itemsize \
        + b * t * 3 * d_out * 4  # f32 scratch
    assert resident_bytes <= _VMEM_RESIDENT_LIMIT_BYTES, (
        "Problem too large for the gridless VMEM-resident kernel; "
        "switch to a flash-style tiled grid.")

    # Flatten batch into rows for the fused projection (free XLA reshape).
    x2d = x.reshape(b * t, d_in)

    flops = (2 * b * t * d_in * 3 * d_out      # QKV projection
             + 2 * b * t * t * d_out           # scores
             + 2 * b * t * t * d_out)          # context
    cost = pl.CostEstimate(
        flops=flops,
        transcendentals=b * t * t,             # exp in the softmax
        bytes_accessed=(b * t * d_in + d_in * 3 * d_out + b * t * d_out) * itemsize,
    )

    kernel = functools.partial(_attention_kernel, batch=b, seq=t, d_out=d_out)

    out2d = pl.pallas_call(
        kernel,
        out_shape=jax.ShapeDtypeStruct((b * t, d_out), x.dtype),
        # Single kernel invocation (no grid): whole arrays resident in VMEM.
        in_specs=[
            pl.BlockSpec(memory_space=pltpu.MemorySpace.VMEM),
            pl.BlockSpec(memory_space=pltpu.MemorySpace.VMEM),
        ],
        out_specs=pl.BlockSpec(memory_space=pltpu.MemorySpace.VMEM),
        scratch_shapes=[pltpu.VMEM((b * t, 3 * d_out), jnp.float32)],
        cost_estimate=cost,
    )(x2d, wqkv)

    return out2d.reshape(b, t, d_out)


def _reference(x, wq, wk, wv):
    q = x @ wq
    k = x @ wk
    v = x @ wv
    scores = jnp.einsum("btd,bsd->bts", q, k) / jnp.sqrt(jnp.float32(wq.shape[1]))
    attn = jax.nn.softmax(scores, axis=-1)
    return jnp.einsum("bts,bsd->btd", attn, v)


if __name__ == "__main__":
    # Inputs: the exact batch from the module's construction snippet.
    inputs_1 = jnp.array(
        [[0.43, 0.15, 0.89], [0.55, 0.87, 0.66], [0.57, 0.85, 0.64],
         [0.22, 0.58, 0.33], [0.77, 0.25, 0.10], [0.05, 0.80, 0.55]],
        dtype=jnp.float32)
    inputs_2 = jnp.array(
        [[0.9755, 0.6623, 0.7943], [0.0189, 0.4839, 0.4241],
         [0.8391, 0.4353, 0.4203], [0.9441, 0.5227, 0.8878],
         [0.5871, 0.5157, 0.0359], [0.7861, 0.7323, 0.1976]],
        dtype=jnp.float32)
    batch = jnp.stack((inputs_1, inputs_2))          # (2, 6, 3)
    assert batch.shape == (BATCH, SEQ, D_IN)

    # Deterministic parameter init (mimics nn.Linear uniform(-1/sqrt(d_in), 1/sqrt(d_in))).
    key = jax.random.PRNGKey(0)
    kq, kk, kv = jax.random.split(key, 3)
    bound = 1.0 / (D_IN ** 0.5)
    w_query = jax.random.uniform(kq, (D_IN, D_OUT), jnp.float32, -bound, bound)
    w_key = jax.random.uniform(kk, (D_IN, D_OUT), jnp.float32, -bound, bound)
    w_value = jax.random.uniform(kv, (D_IN, D_OUT), jnp.float32, -bound, bound)

    # Fuse projection weights ONCE (hoisted out of the per-call forward path).
    wqkv = jax.block_until_ready(fuse_qkv_weights(w_query, w_key, w_value))

    out = causal_attention(batch, wqkv)
    out = jax.block_until_ready(out)

    ref = _reference(batch, w_query, w_key, w_value)
    assert out.shape == (BATCH, SEQ, D_OUT)
    # Exact f32 softmax divide -> tight f32 tolerance.
    assert jnp.allclose(out, ref, atol=1e-5, rtol=1e-5), "mismatch vs JAX reference"

    print("KERNEL_OK")
</pallas_src>

<mosaic_0001>
module attributes {stable_mosaic.version = 11 : i64} {
  func.func @_attention_kernel(%arg0: memref<12x3xf32, #tpu.memory_space<vmem>>, %arg1: memref<3x6xf32, #tpu.memory_space<vmem>>, %arg2: memref<12x2xf32, #tpu.memory_space<vmem>>, %arg3: memref<12x6xf32, #tpu.memory_space<vmem>>) attributes {dimension_semantics = [], scalar_prefetch = 0 : i64, scratch_operands = 1 : i64, tpu.core_type = #tpu.core_type<tc>} {
    %c0 = arith.constant 0 : index
    %c0_0 = arith.constant 0 : index
    %0 = vector.load %arg0[%c0, %c0_0] : memref<12x3xf32, #tpu.memory_space<vmem>>, vector<12x3xf32>
    %c0_1 = arith.constant 0 : index
    %c0_2 = arith.constant 0 : index
    %1 = vector.load %arg1[%c0_1, %c0_2] : memref<3x6xf32, #tpu.memory_space<vmem>>, vector<3x6xf32>
    %cst = arith.constant 2.000000e+00 : f32
    %2 = math.sqrt %cst : f32
    %cst_3 = arith.constant 1.000000e+00 : f32
    %3 = arith.divf %cst_3, %2 : f32
    %cst_4 = arith.constant dense<0.000000e+00> : vector<12x6xf32>
    %4 = tpu.matmul %0, %1, %cst_4 {dimension_numbers = #tpu.dot_dimension_numbers<[1], [0], [0], [1], [0, 0, 1, 1], [], []>} : vector<12x3xf32>, vector<3x6xf32>, vector<12x6xf32> -> vector<12x6xf32>
    %c0_5 = arith.constant 0 : index
    %c0_6 = arith.constant 0 : index
    %5 = vector.load %arg3[%c0_5, %c0_6] : memref<12x6xf32, #tpu.memory_space<vmem>>, vector<12x6xf32>
    tpu.vector_store %arg3[%c0_5, %c0_6], %4 {strides = array<i32>} : memref<12x6xf32, #tpu.memory_space<vmem>>, vector<12x6xf32>,
    %c0_7 = arith.constant 0 : index
    %c0_8 = arith.constant 0 : index
    %6 = vector.load %arg3[%c0_7, %c0_8] : memref<12x6xf32, #tpu.memory_space<vmem>>, vector<6x2xf32>
    %c0_9 = arith.constant 0 : index
    %c2 = arith.constant 2 : index
    %7 = vector.load %arg3[%c0_9, %c2] : memref<12x6xf32, #tpu.memory_space<vmem>>, vector<6x2xf32>
    %c0_10 = arith.constant 0 : index
    %c4 = arith.constant 4 : index
    %8 = vector.load %arg3[%c0_10, %c4] : memref<12x6xf32, #tpu.memory_space<vmem>>, vector<6x2xf32>
    %cst_11 = arith.constant dense<0.000000e+00> : vector<6x6xf32>
    %9 = tpu.matmul %6, %7, %cst_11 {dimension_numbers = #tpu.dot_dimension_numbers<[1], [1], [0], [0], [0, 0, 1, 0], [], []>} : vector<6x2xf32>, vector<6x2xf32>, vector<6x6xf32> -> vector<6x6xf32>
    %10 = vector.broadcast %3 : f32 to vector<6x6xf32>
    %11 = arith.mulf %9, %10 : vector<6x6xf32>
    %cst_12 = arith.constant dense<0xFF800000> : vector<6xf32>
    %12 = vector.multi_reduction <maximumf>, %11, %cst_12 [1] : vector<6x6xf32> to vector<6xf32>
    %13 = vector.shape_cast %12 : vector<6xf32> to vector<6x1xf32>
    %14 = vector.broadcast %13 : vector<6x1xf32> to vector<6x6xf32>
    %15 = arith.subf %11, %14 : vector<6x6xf32>
    %16 = math.exp %15 : vector<6x6xf32>
    %cst_13 = arith.constant dense<0.000000e+00> : vector<6xf32>
    %17 = vector.multi_reduction <add>, %16, %cst_13 [1] : vector<6x6xf32> to vector<6xf32>
    %18 = vector.shape_cast %17 : vector<6xf32> to vector<6x1xf32>
    %19 = vector.broadcast %18 : vector<6x1xf32> to vector<6x6xf32>
    %20 = arith.divf %16, %19 : vector<6x6xf32>
    %cst_14 = arith.constant dense<0.000000e+00> : vector<6x2xf32>
    %21 = tpu.matmul %20, %8, %cst_14 {dimension_numbers = #tpu.dot_dimension_numbers<[1], [0], [0], [1], [0, 0, 1, 1], [], []>} : vector<6x6xf32>, vector<6x2xf32>, vector<6x2xf32> -> vector<6x2xf32>
    %c0_15 = arith.constant 0 : index
    %c0_16 = arith.constant 0 : index
    %22 = vector.load %arg2[%c0_15, %c0_16] : memref<12x2xf32, #tpu.memory_space<vmem>>, vector<6x2xf32>
    tpu.vector_store %arg2[%c0_15, %c0_16], %21 {strides = array<i32>} : memref<12x2xf32, #tpu.memory_space<vmem>>, vector<6x2xf32>,
    %c6 = arith.constant 6 : index
    %c0_17 = arith.constant 0 : index
    %23 = vector.load %arg3[%c6, %c0_17] : memref<12x6xf32, #tpu.memory_space<vmem>>, vector<6x2xf32>
    %c6_18 = arith.constant 6 : index
    %c2_19 = arith.constant 2 : index
    %24 = vector.load %arg3[%c6_18, %c2_19] : memref<12x6xf32, #tpu.memory_space<vmem>>, vector<6x2xf32>
    %c6_20 = arith.constant 6 : index
    %c4_21 = arith.constant 4 : index
    %25 = vector.load %arg3[%c6_20, %c4_21] : memref<12x6xf32, #tpu.memory_space<vmem>>, vector<6x2xf32>
    %cst_22 = arith.constant dense<0.000000e+00> : vector<6x6xf32>
    %26 = tpu.matmul %23, %24, %cst_22 {dimension_numbers = #tpu.dot_dimension_numbers<[1], [1], [0], [0], [0, 0, 1, 0], [], []>} : vector<6x2xf32>, vector<6x2xf32>, vector<6x6xf32> -> vector<6x6xf32>
    %27 = vector.broadcast %3 : f32 to vector<6x6xf32>
    %28 = arith.mulf %26, %27 : vector<6x6xf32>
    %cst_23 = arith.constant dense<0xFF800000> : vector<6xf32>
    %29 = vector.multi_reduction <maximumf>, %28, %cst_23 [1] : vector<6x6xf32> to vector<6xf32>
    %30 = vector.shape_cast %29 : vector<6xf32> to vector<6x1xf32>
    %31 = vector.broadcast %30 : vector<6x1xf32> to vector<6x6xf32>
    %32 = arith.subf %28, %31 : vector<6x6xf32>
    %33 = math.exp %32 : vector<6x6xf32>
    %cst_24 = arith.constant dense<0.000000e+00> : vector<6xf32>
    %34 = vector.multi_reduction <add>, %33, %cst_24 [1] : vector<6x6xf32> to vector<6xf32>
    %35 = vector.shape_cast %34 : vector<6xf32> to vector<6x1xf32>
    %36 = vector.broadcast %35 : vector<6x1xf32> to vector<6x6xf32>
    %37 = arith.divf %33, %36 : vector<6x6xf32>
    %cst_25 = arith.constant dense<0.000000e+00> : vector<6x2xf32>
    %38 = tpu.matmul %37, %25, %cst_25 {dimension_numbers = #tpu.dot_dimension_numbers<[1], [0], [0], [1], [0, 0, 1, 1], [], []>} : vector<6x6xf32>, vector<6x2xf32>, vector<6x2xf32> -> vector<6x2xf32>
    %c6_26 = arith.constant 6 : index
    %c0_27 = arith.constant 0 : index
    %39 = vector.load %arg2[%c6_26, %c0_27] : memref<12x2xf32, #tpu.memory_space<vmem>>, vector<6x2xf32>
    tpu.vector_store %arg2[%c6_26, %c0_27], %38 {strides = array<i32>} : memref<12x2xf32, #tpu.memory_space<vmem>>, vector<6x2xf32>,
    return
  }
}

</mosaic_0001>

<llo_original>
// kernel: tpu_custom_call.1
$region0: #{tpu_custom_call.1}
  #allocation0 [shape = 'u32[]', space=smem, size = 0x4, offset = 0x4, fixed_abs, tag = 'smem constant byte address 0x4 - core index']
  #allocation1 [shape = 'u32[144,128]{1,0:T(1,128)}', space=vmem, size = 0x12000, scoped, tag = 'internal scratch']
  #allocation2 [shape = 'f32[12,6]{1,0:T(8,128)}', space=vmem, size = 0x2000, scoped, tag = 'scratch operand']
  %s0 = inlined_call_operand.vmem [shape: f32[12,3], index: 0, kind: input, shape index: {}]
  %s1 = inlined_call_operand.vmem [shape: f32[3,6], index: 1, kind: input, shape index: {}]
  %s2 = inlined_call_operand.vmem [shape: f32[12,2], index: 2, kind: output, shape index: {}]
  %s3 = sld [smem:[#allocation0]]
  $region18: #{tpu_custom_call.1} parent=0
    _
  %s5 = ssub.s32 1, %s3
  %s6 = scalar_select 0, %s5, %s3
  // Predicated region
  $region2: #{tpu_custom_call.1} parent=0 // pred_check
    _
  $region3: #{tpu_custom_call.1} parent=0 // pred_check_branch
    %8 = sbr.rel (0) target = $region5
  $region4: #{tpu_custom_call.1} parent=0 // pred_region
    _
  $region5: #{tpu_custom_call.1} parent=0 // pred_fallthru
    _
  // Predicated region
  $region6: #{tpu_custom_call.1} parent=0 // pred_check
    _
  $region7: #{tpu_custom_call.1} parent=0 // pred_check_branch
    %10 = sbr.rel (0) target = $region9
  $region8: #{tpu_custom_call.1} parent=0 // pred_region
    _
  $region9: #{tpu_custom_call.1} parent=0 // pred_fallthru
    _
  %v11 = vld [vmem:[%s0] sm:$0xff]
  %v12 = vld [vmem:[%s0 + $0x8] sm:$0xf]
  %v13 = vld [vmem:[%s1] sm:$0x7]
  %vm14 = vcmask 23552
  %v16 = vsel %vm14, %v11, 0
  %v19 = vsel %vm14, %v12, 0
  %vm21 = vcmask 1042432
  %v23 = vsel %vm21, %v13, 0
  %25 = vmatprep.subr.mxu0 0.0
  %26 = vmatpush1.msra.mxu0 %v23
  %27 = vmatprep.subr.mxu0 0.0
  %28 = vmatpush1.msra.mxu0 0.0
  %29 = vmatprep.subr.mxu0 0.0
  %30 = vmatpush1.msra.mxu0 0.0
  %31 = vmatprep.subr.mxu0 0.0
  %32 = vmatpush1.msra.mxu0 0.0
  %33 = vmatprep.subr.mxu0 0.0
  %34 = vmatpush1.msra.mxu0 0.0
  %35 = vmatprep.subr.mxu0 0.0
  %36 = vmatpush1.msra.mxu0 0.0
  %37 = vmatprep.subr.mxu0 0.0
  %38 = vmatpush1.msra.mxu0 0.0
  %39 = vmatprep.subr.mxu0 0.0
  %40 = vmatpush1.msra.mxu0 0.0
  %41 = vmatprep.subr.mxu0 0.0
  %42 = vmatpush1.msra.mxu0 0.0
  %43 = vmatprep.subr.mxu0 0.0
  %44 = vmatpush1.msra.mxu0 0.0
  %45 = vmatprep.subr.mxu0 0.0
  %46 = vmatpush1.msra.mxu0 0.0
  %47 = vmatprep.subr.mxu0 0.0
  %48 = vmatpush1.msra.mxu0 0.0
  %49 = vmatprep.subr.mxu0 0.0
  %50 = vmatpush1.msra.mxu0 0.0
  %51 = vmatprep.subr.mxu0 0.0
  %52 = vmatpush1.msra.mxu0 0.0
  %53 = vmatprep.subr.mxu0 0.0
  %54 = vmatpush1.msra.mxu0 0.0
  %55 = vmatprep.subr.mxu0 0.0
  %56 = vmatpush1.msra.mxu0 0.0
  %57 = vmatprep.subr.mxu0 0.0
  %58 = vmatpush1.msra.mxu0 0.0
  %59 = vmatprep.subr.mxu0 0.0
  %60 = vmatpush1.msra.mxu0 0.0
  %61 = vmatprep.subr.mxu0 0.0
  %62 = vmatpush1.msra.mxu0 0.0
  %63 = vmatprep.subr.mxu0 0.0
  %64 = vmatpush1.msra.mxu0 0.0
  %65 = vmatprep.subr.mxu0 0.0
  %66 = vmatpush1.msra.mxu0 0.0
  %67 = vmatprep.subr.mxu0 0.0
  %68 = vmatpush1.msra.mxu0 0.0
  %69 = vmatprep.subr.mxu0 0.0
  %70 = vmatpush1.msra.mxu0 0.0
  %71 = vmatprep.subr.mxu0 0.0
  %72 = vmatpush1.msra.mxu0 0.0
  %73 = vmatprep.subr.mxu0 0.0
  %74 = vmatpush1.msra.mxu0 0.0
  %75 = vmatprep.subr.mxu0 0.0
  %76 = vmatpush1.msra.mxu0 0.0
  %77 = vmatprep.subr.mxu0 0.0
  %78 = vmatpush1.msra.mxu0 0.0
  %79 = vmatprep.subr.mxu0 0.0
  %80 = vmatpush1.msra.mxu0 0.0
  %81 = vmatprep.subr.mxu0 0.0
  %82 = vmatpush1.msra.mxu0 0.0
  %83 = vmatprep.subr.mxu0 0.0
  %84 = vmatpush1.msra.mxu0 0.0
  %85 = vmatprep.subr.mxu0 0.0
  %86 = vmatpush1.msra.mxu0 0.0
  %87 = vmatprep.subr.mxu0 0.0
  %88 = vmatpush1.msra.mxu0 0.0
  %89 = vmatprep.mubr.f32.mxu0 0.0
  %90 = vmatmul.mubr.f32.gmra.mrb[0].mxu0 %v16
  %v91 = vpop.f32.mrb[0].mxu0
  %v92 = vadd.f32 0.0, %v91
  %v93 = vpop.f32.mrb[0].mxu0
  %94 = vmatprep.mubr.f32.mxu0 0.0
  %95 = vmatmul.mubr.f32.gmra.mrb[0].mxu0 %v19
  %v96 = vpop.f32.mrb[0].mxu0
  %v97 = vadd.f32 0.0, %v96
  %v98 = vpop.f32.mrb[0].mxu0
  %99 = vdwg.mxu0
  %vm100 = vcmask 48128
  %101 = vst.msk [vmem:[#allocation2] sm:$0xff] %vm100, %v92
  %vm102 = vcmask 44032
  %103 = vst.msk [vmem:[#allocation2 + $0x8] sm:$0xf] %vm102, %v97
  %v104 = vld [vmem:[#allocation2] sm:$0x3f]
  %106 = vrot.lane.b32.xlu0 %v104, 126
  %v107 = vpop.permute.xlu0 %106
  %vm108 = vcmask 15360
  %v109 = vsel %vm108, %v104, 0
  %v111 = vsel %vm108, %v107, 0
  %113 = vmatprep.subr.mxu0 0.0
  %114 = vmatpush1.xpose.msra.mxu0 %v111
  %115 = vmatprep.subr.mxu0 0.0
  %116 = vmatpush1.xpose.msra.mxu0 0.0
  %117 = vmatprep.subr.mxu0 0.0
  %118 = vmatpush1.xpose.msra.mxu0 0.0
  %119 = vmatprep.subr.mxu0 0.0
  %120 = vmatpush1.xpose.msra.mxu0 0.0
  %121 = vmatprep.subr.mxu0 0.0
  %122 = vmatpush1.xpose.msra.mxu0 0.0
  %123 = vmatprep.subr.mxu0 0.0
  %124 = vmatpush1.xpose.msra.mxu0 0.0
  %125 = vmatprep.subr.mxu0 0.0
  %126 = vmatpush1.xpose.msra.mxu0 0.0
  %127 = vmatprep.subr.mxu0 0.0
  %128 = vmatpush1.xpose.msra.mxu0 0.0
  %129 = vmatprep.subr.mxu0 0.0
  %130 = vmatpush1.xpose.msra.mxu0 0.0
  %131 = vmatprep.subr.mxu0 0.0
  %132 = vmatpush1.xpose.msra.mxu0 0.0
  %133 = vmatprep.subr.mxu0 0.0
  %134 = vmatpush1.xpose.msra.mxu0 0.0
  %135 = vmatprep.subr.mxu0 0.0
  %136 = vmatpush1.xpose.msra.mxu0 0.0
  %137 = vmatprep.subr.mxu0 0.0
  %138 = vmatpush1.xpose.msra.mxu0 0.0
  %139 = vmatprep.subr.mxu0 0.0
  %140 = vmatpush1.xpose.msra.mxu0 0.0
  %141 = vmatprep.subr.mxu0 0.0
  %142 = vmatpush1.xpose.msra.mxu0 0.0
  %143 = vmatprep.subr.mxu0 0.0
  %144 = vmatpush1.xpose.msra.mxu0 0.0
  %145 = vmatprep.subr.mxu0 0.0
  %146 = vmatpush1.xpose.msra.mxu0 0.0
  %147 = vmatprep.subr.mxu0 0.0
  %148 = vmatpush1.xpose.msra.mxu0 0.0
  %149 = vmatprep.subr.mxu0 0.0
  %150 = vmatpush1.xpose.msra.mxu0 0.0
  %151 = vmatprep.subr.mxu0 0.0
  %152 = vmatpush1.xpose.msra.mxu0 0.0
  %153 = vmatprep.subr.mxu0 0.0
  %154 = vmatpush1.xpose.msra.mxu0 0.0
  %155 = vmatprep.subr.mxu0 0.0
  %156 = vmatpush1.xpose.msra.mxu0 0.0
  %157 = vmatprep.subr.mxu0 0.0
  %158 = vmatpush1.xpose.msra.mxu0 0.0
  %159 = vmatprep.subr.mxu0 0.0
  %160 = vmatpush1.xpose.msra.mxu0 0.0
  %161 = vmatprep.subr.mxu0 0.0
  %162 = vmatpush1.xpose.msra.mxu0 0.0
  %163 = vmatprep.subr.mxu0 0.0
  %164 = vmatpush1.xpose.msra.mxu0 0.0
  %165 = vmatprep.subr.mxu0 0.0
  %166 = vmatpush1.xpose.msra.mxu0 0.0
  %167 = vmatprep.subr.mxu0 0.0
  %168 = vmatpush1.xpose.msra.mxu0 0.0
  %169 = vmatprep.subr.mxu0 0.0
  %170 = vmatpush1.xpose.msra.mxu0 0.0
  %171 = vmatprep.subr.mxu0 0.0
  %172 = vmatpush1.xpose.msra.mxu0 0.0
  %173 = vmatprep.subr.mxu0 0.0
  %174 = vmatpush1.xpose.msra.mxu0 0.0
  %175 = vmatprep.subr.mxu0 0.0
  %176 = vmatpush1.xpose.msra.mxu0 0.0
  %177 = vmatprep.mubr.f32.mxu0 0.0
  %178 = vmatmul.mubr.f32.gmra.mrb[0].mxu0 %v109
  %v179 = vpop.f32.mrb[0].mxu0
  %v180 = vadd.f32 0.0, %v179
  %v181 = vpop.f32.mrb[0].mxu0
  %182 = vdwg.mxu0
  %v183 = vmul.f32 %v180, 0.70710677
  %vm184 = vcmask 46080
  %v185 = vsel %vm184, %v183, -inf
  %186 = vmax.xlane.f32.xlu0 %v185
  %v187 = vpop.xlane.xlu0 %186
  %v188 = vsub.f32 %v183, %v187
  %v189 = vmul.f32 %v188, 1.442695
  %v190 = vpow.pop %v189
  %v191 = vsel %vm184, %v190, 0.0
  %192 = vadd.xlane.f32.xlu0 %v191
  %v193 = vpop.xlane.xlu0 %192
  %v194 = vrcp.pop %v193
  %v195 = vmul.f32 %v190, %v194
  %196 = vrot.lane.b32.xlu0 %v104, 124
  %v197 = vpop.permute.xlu0 %196
  %v199 = vsel %vm100, %v195, 0
  %vm201 = vcmask 1045504
  %v202 = vsel %vm201, %v197, 0
  %204 = vmatprep.subr.mxu0 0.0
  %205 = vmatpush1.msra.mxu0 %v202
  %206 = vmatprep.subr.mxu0 0.0
  %207 = vmatpush1.msra.mxu0 0.0
  %208 = vmatprep.subr.mxu0 0.0
  %209 = vmatpush1.msra.mxu0 0.0
  %210 = vmatprep.subr.mxu0 0.0
  %211 = vmatpush1.msra.mxu0 0.0
  %212 = vmatprep.subr.mxu0 0.0
  %213 = vmatpush1.msra.mxu0 0.0
  %214 = vmatprep.subr.mxu0 0.0
  %215 = vmatpush1.msra.mxu0 0.0
  %216 = vmatprep.subr.mxu0 0.0
  %217 = vmatpush1.msra.mxu0 0.0
  %218 = vmatprep.subr.mxu0 0.0
  %219 = vmatpush1.msra.mxu0 0.0
  %220 = vmatprep.subr.mxu0 0.0
  %221 = vmatpush1.msra.mxu0 0.0
  %222 = vmatprep.subr.mxu0 0.0
  %223 = vmatpush1.msra.mxu0 0.0
  %224 = vmatprep.subr.mxu0 0.0
  %225 = vmatpush1.msra.mxu0 0.0
  %226 = vmatprep.subr.mxu0 0.0
  %227 = vmatpush1.msra.mxu0 0.0
  %228 = vmatprep.subr.mxu0 0.0
  %229 = vmatpush1.msra.mxu0 0.0
  %230 = vmatprep.subr.mxu0 0.0
  %231 = vmatpush1.msra.mxu0 0.0
  %232 = vmatprep.subr.mxu0 0.0
  %233 = vmatpush1.msra.mxu0 0.0
  %234 = vmatprep.subr.mxu0 0.0
  %235 = vmatpush1.msra.mxu0 0.0
  %236 = vmatprep.subr.mxu0 0.0
  %237 = vmatpush1.msra.mxu0 0.0
  %238 = vmatprep.subr.mxu0 0.0
  %239 = vmatpush1.msra.mxu0 0.0
  %240 = vmatprep.subr.mxu0 0.0
  %241 = vmatpush1.msra.mxu0 0.0
  %242 = vmatprep.subr.mxu0 0.0
  %243 = vmatpush1.msra.mxu0 0.0
  %244 = vmatprep.subr.mxu0 0.0
  %245 = vmatpush1.msra.mxu0 0.0
  %246 = vmatprep.subr.mxu0 0.0
  %247 = vmatpush1.msra.mxu0 0.0
  %248 = vmatprep.subr.mxu0 0.0
  %249 = vmatpush1.msra.mxu0 0.0
  %250 = vmatprep.subr.mxu0 0.0
  %251 = vmatpush1.msra.mxu0 0.0
  %252 = vmatprep.subr.mxu0 0.0
  %253 = vmatpush1.msra.mxu0 0.0
  %254 = vmatprep.subr.mxu0 0.0
  %255 = vmatpush1.msra.mxu0 0.0
  %256 = vmatprep.subr.mxu0 0.0
  %257 = vmatpush1.msra.mxu0 0.0
  %258 = vmatprep.subr.mxu0 0.0
  %259 = vmatpush1.msra.mxu0 0.0
  %260 = vmatprep.subr.mxu0 0.0
  %261 = vmatpush1.msra.mxu0 0.0
  %262 = vmatprep.subr.mxu0 0.0
  %263 = vmatpush1.msra.mxu0 0.0
  %264 = vmatprep.subr.mxu0 0.0
  %265 = vmatpush1.msra.mxu0 0.0
  %266 = vmatprep.subr.mxu0 0.0
  %267 = vmatpush1.msra.mxu0 0.0
  %268 = vmatprep.mubr.f32.mxu0 0.0
  %269 = vmatmul.mubr.f32.gmra.mrb[0].mxu0 %v199
  %v270 = vpop.f32.mrb[0].mxu0
  %v271 = vadd.f32 0.0, %v270
  %v272 = vpop.f32.mrb[0].mxu0
  %273 = vdwg.mxu0
  %vm274 = vcmask 13312
  %275 = vst.msk [vmem:[%s2] sm:$0x3f] %vm274, %v271
  %v276 = vld [vmem:[#allocation2 + $0x6] sm:$0x3f]
  %278 = vrot.lane.b32.xlu0 %v276, 126
  %v279 = vpop.permute.xlu0 %278
  %v280 = vsel %vm108, %v276, 0
  %v282 = vsel %vm108, %v279, 0
  %284 = vmatprep.subr.mxu0 0.0
  %285 = vmatpush1.xpose.msra.mxu0 %v282
  %286 = vmatprep.subr.mxu0 0.0
  %287 = vmatpush1.xpose.msra.mxu0 0.0
  %288 = vmatprep.subr.mxu0 0.0
  %289 = vmatpush1.xpose.msra.mxu0 0.0
  %290 = vmatprep.subr.mxu0 0.0
  %291 = vmatpush1.xpose.msra.mxu0 0.0
  %292 = vmatprep.subr.mxu0 0.0
  %293 = vmatpush1.xpose.msra.mxu0 0.0
  %294 = vmatprep.subr.mxu0 0.0
  %295 = vmatpush1.xpose.msra.mxu0 0.0
  %296 = vmatprep.subr.mxu0 0.0
  %297 = vmatpush1.xpose.msra.mxu0 0.0
  %298 = vmatprep.subr.mxu0 0.0
  %299 = vmatpush1.xpose.msra.mxu0 0.0
  %300 = vmatprep.subr.mxu0 0.0
  %301 = vmatpush1.xpose.msra.mxu0 0.0
  %302 = vmatprep.subr.mxu0 0.0
  %303 = vmatpush1.xpose.msra.mxu0 0.0
  %304 = vmatprep.subr.mxu0 0.0
  %305 = vmatpush1.xpose.msra.mxu0 0.0
  %306 = vmatprep.subr.mxu0 0.0
  %307 = vmatpush1.xpose.msra.mxu0 0.0
  %308 = vmatprep.subr.mxu0 0.0
  %309 = vmatpush1.xpose.msra.mxu0 0.0
  %310 = vmatprep.subr.mxu0 0.0
  %311 = vmatpush1.xpose.msra.mxu0 0.0
  %312 = vmatprep.subr.mxu0 0.0
  %313 = vmatpush1.xpose.msra.mxu0 0.0
  %314 = vmatprep.subr.mxu0 0.0
  %315 = vmatpush1.xpose.msra.mxu0 0.0
  %316 = vmatprep.subr.mxu0 0.0
  %317 = vmatpush1.xpose.msra.mxu0 0.0
  %318 = vmatprep.subr.mxu0 0.0
  %319 = vmatpush1.xpose.msra.mxu0 0.0
  %320 = vmatprep.subr.mxu0 0.0
  %321 = vmatpush1.xpose.msra.mxu0 0.0
  %322 = vmatprep.subr.mxu0 0.0
  %323 = vmatpush1.xpose.msra.mxu0 0.0
  %324 = vmatprep.subr.mxu0 0.0
  %325 = vmatpush1.xpose.msra.mxu0 0.0
  %326 = vmatprep.subr.mxu0 0.0
  %327 = vmatpush1.xpose.msra.mxu0 0.0
  %328 = vmatprep.subr.mxu0 0.0
  %329 = vmatpush1.xpose.msra.mxu0 0.0
  %330 = vmatprep.subr.mxu0 0.0
  %331 = vmatpush1.xpose.msra.mxu0 0.0
  %332 = vmatprep.subr.mxu0 0.0
  %333 = vmatpush1.xpose.msra.mxu0 0.0
  %334 = vmatprep.subr.mxu0 0.0
  %335 = vmatpush1.xpose.msra.mxu0 0.0
  %336 = vmatprep.subr.mxu0 0.0
  %337 = vmatpush1.xpose.msra.mxu0 0.0
  %338 = vmatprep.subr.mxu0 0.0
  %339 = vmatpush1.xpose.msra.mxu0 0.0
  %340 = vmatprep.subr.mxu0 0.0
  %341 = vmatpush1.xpose.msra.mxu0 0.0
  %342 = vmatprep.subr.mxu0 0.0
  %343 = vmatpush1.xpose.msra.mxu0 0.0
  %344 = vmatprep.subr.mxu0 0.0
  %345 = vmatpush1.xpose.msra.mxu0 0.0
  %346 = vmatprep.subr.mxu0 0.0
  %347 = vmatpush1.xpose.msra.mxu0 0.0
  %348 = vmatprep.mubr.f32.mxu0 0.0
  %349 = vmatmul.mubr.f32.gmra.mrb[0].mxu0 %v280
  %v350 = vpop.f32.mrb[0].mxu0
  %v351 = vadd.f32 0.0, %v350
  %v352 = vpop.f32.mrb[0].mxu0
  %353 = vdwg.mxu0
  %v354 = vmul.f32 %v351, 0.70710677
  %v355 = vsel %vm184, %v354, -inf
  %356 = vmax.xlane.f32.xlu0 %v355
  %v357 = vpop.xlane.xlu0 %356
  %v358 = vsub.f32 %v354, %v357
  %v359 = vmul.f32 %v358, 1.442695
  %v360 = vpow.pop %v359
  %v361 = vsel %vm184, %v360, 0.0
  %362 = vadd.xlane.f32.xlu0 %v361
  %v363 = vpop.xlane.xlu0 %362
  %v364 = vrcp.pop %v363
  %v365 = vmul.f32 %v360, %v364
  %366 = vrot.lane.b32.xlu0 %v276, 124
  %v367 = vpop.permute.xlu0 %366
  %v369 = vsel %vm100, %v365, 0
  %v371 = vsel %vm201, %v367, 0
  %373 = vmatprep.subr.mxu0 0.0
  %374 = vmatpush1.msra.mxu0 %v371
  %375 = vmatprep.subr.mxu0 0.0
  %376 = vmatpush1.msra.mxu0 0.0
  %377 = vmatprep.subr.mxu0 0.0
  %378 = vmatpush1.msra.mxu0 0.0
  %379 = vmatprep.subr.mxu0 0.0
  %380 = vmatpush1.msra.mxu0 0.0
  %381 = vmatprep.subr.mxu0 0.0
  %382 = vmatpush1.msra.mxu0 0.0
  %383 = vmatprep.subr.mxu0 0.0
  %384 = vmatpush1.msra.mxu0 0.0
  %385 = vmatprep.subr.mxu0 0.0
  %386 = vmatpush1.msra.mxu0 0.0
  %387 = vmatprep.subr.mxu0 0.0
  %388 = vmatpush1.msra.mxu0 0.0
  %389 = vmatprep.subr.mxu0 0.0
  %390 = vmatpush1.msra.mxu0 0.0
  %391 = vmatprep.subr.mxu0 0.0
  %392 = vmatpush1.msra.mxu0 0.0
  %393 = vmatprep.subr.mxu0 0.0
  %394 = vmatpush1.msra.mxu0 0.0
  %395 = vmatprep.subr.mxu0 0.0
  %396 = vmatpush1.msra.mxu0 0.0
  %397 = vmatprep.subr.mxu0 0.0
  %398 = vmatpush1.msra.mxu0 0.0
  %399 = vmatprep.subr.mxu0 0.0
  %400 = vmatpush1.msra.mxu0 0.0
  %401 = vmatprep.subr.mxu0 0.0
  %402 = vmatpush1.msra.mxu0 0.0
  %403 = vmatprep.subr.mxu0 0.0
  %404 = vmatpush1.msra.mxu0 0.0
  %405 = vmatprep.subr.mxu0 0.0
  %406 = vmatpush1.msra.mxu0 0.0
  %407 = vmatprep.subr.mxu0 0.0
  %408 = vmatpush1.msra.mxu0 0.0
  %409 = vmatprep.subr.mxu0 0.0
  %410 = vmatpush1.msra.mxu0 0.0
  %411 = vmatprep.subr.mxu0 0.0
  %412 = vmatpush1.msra.mxu0 0.0
  %413 = vmatprep.subr.mxu0 0.0
  %414 = vmatpush1.msra.mxu0 0.0
  %415 = vmatprep.subr.mxu0 0.0
  %416 = vmatpush1.msra.mxu0 0.0
  %417 = vmatprep.subr.mxu0 0.0
  %418 = vmatpush1.msra.mxu0 0.0
  %419 = vmatprep.subr.mxu0 0.0
  %420 = vmatpush1.msra.mxu0 0.0
  %421 = vmatprep.subr.mxu0 0.0
  %422 = vmatpush1.msra.mxu0 0.0
  %423 = vmatprep.subr.mxu0 0.0
  %424 = vmatpush1.msra.mxu0 0.0
  %425 = vmatprep.subr.mxu0 0.0
  %426 = vmatpush1.msra.mxu0 0.0
  %427 = vmatprep.subr.mxu0 0.0
  %428 = vmatpush1.msra.mxu0 0.0
  %429 = vmatprep.subr.mxu0 0.0
  %430 = vmatpush1.msra.mxu0 0.0
  %431 = vmatprep.subr.mxu0 0.0
  %432 = vmatpush1.msra.mxu0 0.0
  %433 = vmatprep.subr.mxu0 0.0
  %434 = vmatpush1.msra.mxu0 0.0
  %435 = vmatprep.subr.mxu0 0.0
  %436 = vmatpush1.msra.mxu0 0.0
  %437 = vmatprep.mubr.f32.mxu0 0.0
  %438 = vmatmul.mubr.f32.gmra.mrb[0].mxu0 %v369
  %v439 = vpop.f32.mrb[0].mxu0
  %v440 = vadd.f32 0.0, %v439
  %v441 = vpop.f32.mrb[0].mxu0
  %442 = vdwg.mxu0
  %443 = vst.msk [vmem:[%s2 + $0x6] sm:$0x3f] %vm274, %v440
  // Predicated region
  $region10: #{tpu_custom_call.1} parent=0 // pred_check
    _
  $region11: #{tpu_custom_call.1} parent=0 // pred_check_branch
    %445 = sbr.rel (0) target = $region13
  $region12: #{tpu_custom_call.1} parent=0 // pred_region
    _
  $region13: #{tpu_custom_call.1} parent=0 // pred_fallthru
    _
  // Predicated region
  $region14: #{tpu_custom_call.1} parent=0 // pred_check
    _
  $region15: #{tpu_custom_call.1} parent=0 // pred_check_branch
    %447 = sbr.rel (0) target = $region17
  $region16: #{tpu_custom_call.1} parent=0 // pred_region
    _
  $region17: #{tpu_custom_call.1} parent=0 // pred_fallthru
    _

</llo_original>
